<compile_context>
chip_gen: v6e
topology: v6e:2x2x1
jax: 0.10.0
libtpu: 0.0.40
codegen_flags: <defaults>
</compile_context>

<pallas_src>
import functools

import jax
import jax.numpy as jnp
from jax.experimental import pallas as pl
from jax.experimental.pallas import tpu as pltpu

IGNORE_INDEX = -100
_MASK_VAL = -1.0e30     # value given to out-of-range (ragged last C tile) columns
_M_INIT = -3.0e38       # finite "-inf" init for the running max


def ce_kernel(yhat_ref, y_ref, loss_ref, m_sc, s_sc, t_sc, *, c_rem, tile_c):
    """One (TILE_N, TILE_C) logits tile; online logsumexp over the C grid axis.

    yhat_ref: (TILE_N, TILE_C) logits (any float dtype, upcast to f32 here)
    y_ref:    (TILE_N, 1) int32 labels (block constant along the C axis)
    loss_ref: (TILE_N, 1) f32 per-token loss (0 where label == IGNORE_INDEX)
    m_sc/s_sc/t_sc: (TILE_N, 1) f32 running max / running exp-sum / target logit
    c_rem: C % tile_c (trace-time constant); 0 means no ragged last tile.
    """
    c = pl.program_id(1)
    n_c = pl.num_programs(1)

    @pl.when(c == 0)
    def _init():
        m_sc[...] = jnp.full_like(m_sc, _M_INIT)
        s_sc[...] = jnp.zeros_like(s_sc)
        t_sc[...] = jnp.zeros_like(t_sc)

    labels = y_ref[...]                                   # (TN, 1) int32
    labels_local = labels - c * tile_c                    # shift on the scalar side
    col_local = jax.lax.broadcasted_iota(jnp.int32, yhat_ref.shape, 1)
    raw = yhat_ref[...].astype(jnp.float32)
    # TODO(synk): optional bf16 compute path for the where/sub/exp chain on v7x.

    def update(logits):
        # Online (flash-style) logsumexp update.
        m_tile = jnp.max(logits, axis=-1, keepdims=True)          # (TN, 1)
        m_new = jnp.maximum(m_sc[...], m_tile)
        alpha = jnp.exp(m_sc[...] - m_new)
        p = jnp.exp(logits - m_new)       # masked columns -> exp(~-1e30) == 0
        s_sc[...] = alpha * s_sc[...] + jnp.sum(p, axis=-1, keepdims=True)
        m_sc[...] = m_new
        # Target-logit gather: the label's column lives in exactly one C tile.
        onehot = col_local == labels_local
        t_sc[...] += jnp.sum(jnp.where(onehot, logits, 0.0), axis=-1,
                             keepdims=True)

    if c_rem == 0:
        # C divides tile_c: no padding mask needed on any tile.
        update(raw)
    else:
        is_last = c == n_c - 1

        @pl.when(jnp.logical_not(is_last))
        def _full_tile():
            update(raw)

        @pl.when(is_last)
        def _ragged_tile():
            # Only the tail columns of the very last C tile are out of range.
            update(jnp.where(col_local < c_rem, raw, _MASK_VAL))

    @pl.when(c == n_c - 1)
    def _finalize():
        lse = m_sc[...] + jnp.log(s_sc[...])
        valid = labels != IGNORE_INDEX
        # NOTE: count==0 (all labels ignored) yields NaN, matching PyTorch.
        # Rows past N (garbage logits) carry IGNORE_INDEX labels -> 0 here.
        loss_ref[...] = jnp.where(valid, lse - t_sc[...], 0.0)


def _round_up(x, m):
    return (x + m - 1) // m * m


def _vmem_config():
    """(vmem_limit_bytes, logits-block byte budget) tuned per TPU generation."""
    try:
        cap = pltpu.get_tpu_info().vmem_capacity_bytes
    except Exception:
        cap = 0
    if cap >= 100 * 1024 * 1024:                 # v5e / v6e: 128 MiB physical
        return 64 * 1024 * 1024, 16 * 1024 * 1024
    return 40 * 1024 * 1024, 8 * 1024 * 1024     # v7x (64 MiB) / unknown


def ce_calculation(yhat, y, *, tile_n=None, tile_c=None):
    """yhat: (N, C) float logits (f32 or bf16); y: (N,) int labels (-100 = ignore)."""
    N, C = yhat.shape
    itemsize = jnp.dtype(yhat.dtype).itemsize
    vmem_limit, block_budget = _vmem_config()

    # --- Tile sizing -------------------------------------------------------
    if tile_n is None:
        tile_n = min(_round_up(N, 16), 256)
        # v7x megacore: make sure the "parallel" N axis has >= 2 tiles.
        while pl.cdiv(N, tile_n) < 2 and tile_n > 16:
            tile_n = max(16, (tile_n // 2) // 16 * 16)
    tile_n = max(16, _round_up(tile_n, 16))      # bf16-friendly sublanes

    if tile_c is None:
        cap_c = max(128, (block_budget // (tile_n * itemsize)) // 128 * 128)
        tile_c = min(_round_up(C, 128), cap_c)
    tile_c = _round_up(tile_c, 128)

    grid = (pl.cdiv(N, tile_n), pl.cdiv(C, tile_c))
    n_pad = grid[0] * tile_n

    y_i32 = y.astype(jnp.int32)
    count = jnp.sum((y_i32 != IGNORE_INDEX).astype(jnp.float32))

    # Only the tiny label vector is padded; logits are streamed un-padded and
    # ragged edge tiles are handled inside the kernel.
    y_p = y_i32
    if n_pad != N:
        y_p = jnp.pad(y_i32, (0, n_pad - N), constant_values=IGNORE_INDEX)
    y2 = y_p.reshape(n_pad, 1)

    kernel = functools.partial(ce_kernel, c_rem=C % tile_c, tile_c=tile_c)

    cost = pl.CostEstimate(
        flops=5 * N * C,
        transcendentals=N * C,
        bytes_accessed=N * C * itemsize + 2 * N * 4,
    )

    per_tok = pl.pallas_call(
        kernel,
        out_shape=jax.ShapeDtypeStruct((n_pad, 1), jnp.float32),
        grid_spec=pltpu.PrefetchScalarGridSpec(
            num_scalar_prefetch=0,
            grid=grid,
            in_specs=[
                pl.BlockSpec((tile_n, tile_c), lambda i, c: (i, c)),
                pl.BlockSpec((tile_n, 1), lambda i, c: (i, 0)),  # labels fixed along C
            ],
            out_specs=pl.BlockSpec((tile_n, 1), lambda i, c: (i, 0)),
            scratch_shapes=[pltpu.VMEM((tile_n, 1), jnp.float32)] * 3,
        ),
        compiler_params=pltpu.CompilerParams(
            dimension_semantics=("parallel", "arbitrary"),
            vmem_limit_bytes=vmem_limit,
        ),
        cost_estimate=cost,
    )(yhat, y2)

    # Padded / garbage rows carry IGNORE_INDEX labels -> contribute 0 to the sum.
    return jnp.sum(per_tok) / count


def _reference(yhat, y):
    # Pure-JAX reference of the PyTorch forward.
    logits = yhat.astype(jnp.float32)
    lse = jax.nn.logsumexp(logits, axis=-1)
    safe_y = jnp.where(y == IGNORE_INDEX, 0, y)
    tgt = jnp.take_along_axis(logits, safe_y[:, None], axis=-1)[:, 0]
    valid = y != IGNORE_INDEX
    per = jnp.where(valid, lse - tgt, 0.0)
    return jnp.sum(per) / jnp.sum(valid.astype(jnp.float32))


if __name__ == "__main__":
    key = jax.random.PRNGKey(0)
    k1, k2, k3, k4 = jax.random.split(key, 4)

    # Case 1: small (N=8 tokens, C=32 classes), single grid step, block > array
    # in both dims (exercises OOB-read masking / IGNORE padding of y).
    N, C = 8, 32
    yhat = jax.random.normal(k1, (N, C), dtype=jnp.float32)
    y = jax.random.randint(k2, (N,), 0, C, dtype=jnp.int32)
    y = y.at[1].set(IGNORE_INDEX).at[5].set(IGNORE_INDEX)
    loss = ce_calculation(yhat, y)
    jax.block_until_ready(loss)
    ref = _reference(yhat, y)
    assert jnp.allclose(loss, ref, rtol=1e-5, atol=1e-5), (loss, ref)

    # Case 2: non-divisible shapes + multiple tiles on both axes
    # (ragged last C tile mask + online logsumexp across the C grid + ragged N).
    N2, C2 = 24, 1000
    yhat2 = jax.random.normal(k3, (N2, C2), dtype=jnp.float32) * 4.0
    y2 = jax.random.randint(k4, (N2,), 0, C2, dtype=jnp.int32)
    y2 = y2.at[0].set(IGNORE_INDEX).at[7].set(IGNORE_INDEX)
    loss2 = ce_calculation(yhat2, y2, tile_n=16, tile_c=256)
    jax.block_until_ready(loss2)
    ref2 = _reference(yhat2, y2)
    assert jnp.allclose(loss2, ref2, rtol=1e-4, atol=1e-5), (loss2, ref2)

    # Case 3: bf16 logits in HBM (half the DMA bytes), f32 math in-kernel.
    yhat3 = yhat2.astype(jnp.bfloat16)
    loss3 = ce_calculation(yhat3, y2, tile_n=16, tile_c=256)
    jax.block_until_ready(loss3)
    ref3 = _reference(yhat3.astype(jnp.float32), y2)
    assert jnp.allclose(loss3, ref3, rtol=1e-4, atol=1e-4), (loss3, ref3)

    # Case 4: default tile sizing path (no explicit tiles) on a ragged vocab.
    loss4 = ce_calculation(yhat2, y2)
    jax.block_until_ready(loss4)
    assert jnp.allclose(loss4, ref2, rtol=1e-4, atol=1e-5), (loss4, ref2)

    print("KERNEL_OK")
</pallas_src>

<mosaic_0001>
module attributes {stable_mosaic.version = 11 : i64} {
  func.func @ce_kernel(%arg0: i32, %arg1: i32, %arg2: memref<16x128xf32, #tpu.memory_space<vmem>>, %arg3: memref<16x1xi32, #tpu.memory_space<vmem>>, %arg4: memref<16x1xf32, #tpu.memory_space<vmem>>, %arg5: memref<16x1xf32, #tpu.memory_space<vmem>>, %arg6: memref<16x1xf32, #tpu.memory_space<vmem>>, %arg7: memref<16x1xf32, #tpu.memory_space<vmem>>) attributes {dimension_semantics = [#tpu.dimension_semantics<parallel>, #tpu.dimension_semantics<arbitrary>], iteration_bounds = array<i64: 1, 1>, scalar_prefetch = 0 : i64, scratch_operands = 3 : i64, tpu.core_type = #tpu.core_type<tc>, window_params = [{transform_indices = @transform_0, window_bounds = array<i64: 16, 128>}, {transform_indices = @transform_1, window_bounds = array<i64: 16, 1>}, {transform_indices = @transform_2, window_bounds = array<i64: 16, 1>}]} {
    %c0_i32 = arith.constant 0 : i32
    %0 = arith.cmpi eq, %arg1, %c0_i32 : i32
    %1 = arith.extui %0 : i1 to i32
    %c0_i32_0 = arith.constant 0 : i32
    %2 = arith.cmpi ne, %1, %c0_i32_0 : i32
    scf.if %2 {
      %cst = arith.constant -3.000000e+38 : f32
      %18 = vector.broadcast %cst : f32 to vector<16x1xf32>
      %c0_9 = arith.constant 0 : index
      %c0_10 = arith.constant 0 : index
      %19 = vector.load %arg5[%c0_9, %c0_10] : memref<16x1xf32, #tpu.memory_space<vmem>>, vector<16x1xf32>
      tpu.vector_store %arg5[%c0_9, %c0_10], %18 {strides = array<i32>} : memref<16x1xf32, #tpu.memory_space<vmem>>, vector<16x1xf32>,
      %cst_11 = arith.constant 0.000000e+00 : f32
      %20 = vector.broadcast %cst_11 : f32 to vector<16x1xf32>
      %c0_12 = arith.constant 0 : index
      %c0_13 = arith.constant 0 : index
      %21 = vector.load %arg6[%c0_12, %c0_13] : memref<16x1xf32, #tpu.memory_space<vmem>>, vector<16x1xf32>
      tpu.vector_store %arg6[%c0_12, %c0_13], %20 {strides = array<i32>} : memref<16x1xf32, #tpu.memory_space<vmem>>, vector<16x1xf32>,
      %cst_14 = arith.constant 0.000000e+00 : f32
      %22 = vector.broadcast %cst_14 : f32 to vector<16x1xf32>
      %c0_15 = arith.constant 0 : index
      %c0_16 = arith.constant 0 : index
      %23 = vector.load %arg7[%c0_15, %c0_16] : memref<16x1xf32, #tpu.memory_space<vmem>>, vector<16x1xf32>
      tpu.vector_store %arg7[%c0_15, %c0_16], %22 {strides = array<i32>} : memref<16x1xf32, #tpu.memory_space<vmem>>, vector<16x1xf32>,
    } else {
    }
    %c0 = arith.constant 0 : index
    %c0_1 = arith.constant 0 : index
    %3 = vector.load %arg3[%c0, %c0_1] : memref<16x1xi32, #tpu.memory_space<vmem>>, vector<16x1xi32>
    %c128_i32 = arith.constant 128 : i32
    %4 = arith.muli %arg1, %c128_i32 : i32
    %5 = vector.broadcast %4 : i32 to vector<16x1xi32>
    %6 = arith.subi %3, %5 : vector<16x1xi32>
    %7 = tpu.iota {dimensions = array<i32: 1>} : vector<16x128xi32>
    %c0_2 = arith.constant 0 : index
    %c0_3 = arith.constant 0 : index
    %8 = vector.load %arg2[%c0_2, %c0_3] : memref<16x128xf32, #tpu.memory_space<vmem>>, vector<16x128xf32>
    %c0_i32_4 = arith.constant 0 : i32
    %9 = arith.cmpi eq, %arg1, %c0_i32_4 : i32
    %true = arith.constant true
    %10 = arith.xori %9, %true : i1
    %11 = arith.extui %10 : i1 to i32
    %c0_i32_5 = arith.constant 0 : i32
    %12 = arith.cmpi ne, %11, %c0_i32_5 : i32
    scf.if %12 {
      %cst = arith.constant dense<0xFF800000> : vector<16xf32>
      %18 = vector.multi_reduction <maximumf>, %8, %cst [1] : vector<16x128xf32> to vector<16xf32>
      %19 = vector.shape_cast %18 : vector<16xf32> to vector<16x1xf32>
      %c0_9 = arith.constant 0 : index
      %c0_10 = arith.constant 0 : index
      %20 = vector.load %arg5[%c0_9, %c0_10] : memref<16x1xf32, #tpu.memory_space<vmem>>, vector<16x1xf32>
      %21 = arith.maximumf %20, %19 : vector<16x1xf32>
      %c0_11 = arith.constant 0 : index
      %c0_12 = arith.constant 0 : index
      %22 = vector.load %arg5[%c0_11, %c0_12] : memref<16x1xf32, #tpu.memory_space<vmem>>, vector<16x1xf32>
      %23 = arith.subf %22, %21 : vector<16x1xf32>
      %24 = math.exp %23 : vector<16x1xf32>
      %25 = vector.broadcast %21 : vector<16x1xf32> to vector<16x128xf32>
      %26 = arith.subf %8, %25 : vector<16x128xf32>
      %27 = math.exp %26 : vector<16x128xf32>
      %c0_13 = arith.constant 0 : index
      %c0_14 = arith.constant 0 : index
      %28 = vector.load %arg6[%c0_13, %c0_14] : memref<16x1xf32, #tpu.memory_space<vmem>>, vector<16x1xf32>
      %29 = arith.mulf %24, %28 : vector<16x1xf32>
      %cst_15 = arith.constant dense<0.000000e+00> : vector<16xf32>
      %30 = vector.multi_reduction <add>, %27, %cst_15 [1] : vector<16x128xf32> to vector<16xf32>
      %31 = vector.shape_cast %30 : vector<16xf32> to vector<16x1xf32>
      %32 = arith.addf %29, %31 : vector<16x1xf32>
      %c0_16 = arith.constant 0 : index
      %c0_17 = arith.constant 0 : index
      %33 = vector.load %arg6[%c0_16, %c0_17] : memref<16x1xf32, #tpu.memory_space<vmem>>, vector<16x1xf32>
      tpu.vector_store %arg6[%c0_16, %c0_17], %32 {strides = array<i32>} : memref<16x1xf32, #tpu.memory_space<vmem>>, vector<16x1xf32>,
      %c0_18 = arith.constant 0 : index
      %c0_19 = arith.constant 0 : index
      %34 = vector.load %arg5[%c0_18, %c0_19] : memref<16x1xf32, #tpu.memory_space<vmem>>, vector<16x1xf32>
      tpu.vector_store %arg5[%c0_18, %c0_19], %21 {strides = array<i32>} : memref<16x1xf32, #tpu.memory_space<vmem>>, vector<16x1xf32>,
      %35 = vector.broadcast %6 : vector<16x1xi32> to vector<16x128xi32>
      %36 = arith.cmpi eq, %7, %35 : vector<16x128xi32>
      %c0_20 = arith.constant 0 : index
      %c0_21 = arith.constant 0 : index
      %37 = vector.load %arg7[%c0_20, %c0_21] : memref<16x1xf32, #tpu.memory_space<vmem>>, vector<16x1xf32>
      %cst_22 = arith.constant 0.000000e+00 : f32
      %38 = vector.broadcast %cst_22 : f32 to vector<16x128xf32>
      %39 = arith.select %36, %8, %38 : vector<16x128xi1>, vector<16x128xf32>
      %cst_23 = arith.constant dense<0.000000e+00> : vector<16xf32>
      %40 = vector.multi_reduction <add>, %39, %cst_23 [1] : vector<16x128xf32> to vector<16xf32>
      %41 = vector.shape_cast %40 : vector<16xf32> to vector<16x1xf32>
      %42 = arith.addf %37, %41 : vector<16x1xf32>
      %c0_24 = arith.constant 0 : index
      %c0_25 = arith.constant 0 : index
      %43 = vector.load %arg7[%c0_24, %c0_25] : memref<16x1xf32, #tpu.memory_space<vmem>>, vector<16x1xf32>
      tpu.vector_store %arg7[%c0_24, %c0_25], %42 {strides = array<i32>} : memref<16x1xf32, #tpu.memory_space<vmem>>, vector<16x1xf32>,
    } else {
    }
    %13 = arith.extui %9 : i1 to i32
    %c0_i32_6 = arith.constant 0 : i32
    %14 = arith.cmpi ne, %13, %c0_i32_6 : i32
    scf.if %14 {
      %c32_i32 = arith.constant 32 : i32
      %18 = vector.broadcast %c32_i32 : i32 to vector<16x128xi32>
      %19 = arith.cmpi slt, %7, %18 : vector<16x128xi32>
      %cst = arith.constant -1.000000e+30 : f32
      %20 = vector.broadcast %cst : f32 to vector<16x128xf32>
      %21 = arith.select %19, %8, %20 : vector<16x128xi1>, vector<16x128xf32>
      %cst_9 = arith.constant dense<0xFF800000> : vector<16xf32>
      %22 = vector.multi_reduction <maximumf>, %21, %cst_9 [1] : vector<16x128xf32> to vector<16xf32>
      %23 = vector.shape_cast %22 : vector<16xf32> to vector<16x1xf32>
      %c0_10 = arith.constant 0 : index
      %c0_11 = arith.constant 0 : index
      %24 = vector.load %arg5[%c0_10, %c0_11] : memref<16x1xf32, #tpu.memory_space<vmem>>, vector<16x1xf32>
      %25 = arith.maximumf %24, %23 : vector<16x1xf32>
      %c0_12 = arith.constant 0 : index
      %c0_13 = arith.constant 0 : index
      %26 = vector.load %arg5[%c0_12, %c0_13] : memref<16x1xf32, #tpu.memory_space<vmem>>, vector<16x1xf32>
      %27 = arith.subf %26, %25 : vector<16x1xf32>
      %28 = math.exp %27 : vector<16x1xf32>
      %29 = vector.broadcast %25 : vector<16x1xf32> to vector<16x128xf32>
      %30 = arith.subf %21, %29 : vector<16x128xf32>
      %31 = math.exp %30 : vector<16x128xf32>
      %c0_14 = arith.constant 0 : index
      %c0_15 = arith.constant 0 : index
      %32 = vector.load %arg6[%c0_14, %c0_15] : memref<16x1xf32, #tpu.memory_space<vmem>>, vector<16x1xf32>
      %33 = arith.mulf %28, %32 : vector<16x1xf32>
      %cst_16 = arith.constant dense<0.000000e+00> : vector<16xf32>
      %34 = vector.multi_reduction <add>, %31, %cst_16 [1] : vector<16x128xf32> to vector<16xf32>
      %35 = vector.shape_cast %34 : vector<16xf32> to vector<16x1xf32>
      %36 = arith.addf %33, %35 : vector<16x1xf32>
      %c0_17 = arith.constant 0 : index
      %c0_18 = arith.constant 0 : index
      %37 = vector.load %arg6[%c0_17, %c0_18] : memref<16x1xf32, #tpu.memory_space<vmem>>, vector<16x1xf32>
      tpu.vector_store %arg6[%c0_17, %c0_18], %36 {strides = array<i32>} : memref<16x1xf32, #tpu.memory_space<vmem>>, vector<16x1xf32>,
      %c0_19 = arith.constant 0 : index
      %c0_20 = arith.constant 0 : index
      %38 = vector.load %arg5[%c0_19, %c0_20] : memref<16x1xf32, #tpu.memory_space<vmem>>, vector<16x1xf32>
      tpu.vector_store %arg5[%c0_19, %c0_20], %25 {strides = array<i32>} : memref<16x1xf32, #tpu.memory_space<vmem>>, vector<16x1xf32>,
      %39 = vector.broadcast %6 : vector<16x1xi32> to vector<16x128xi32>
      %40 = arith.cmpi eq, %7, %39 : vector<16x128xi32>
      %c0_21 = arith.constant 0 : index
      %c0_22 = arith.constant 0 : index
      %41 = vector.load %arg7[%c0_21, %c0_22] : memref<16x1xf32, #tpu.memory_space<vmem>>, vector<16x1xf32>
      %cst_23 = arith.constant 0.000000e+00 : f32
      %42 = vector.broadcast %cst_23 : f32 to vector<16x128xf32>
      %43 = arith.select %40, %21, %42 : vector<16x128xi1>, vector<16x128xf32>
      %cst_24 = arith.constant dense<0.000000e+00> : vector<16xf32>
      %44 = vector.multi_reduction <add>, %43, %cst_24 [1] : vector<16x128xf32> to vector<16xf32>
      %45 = vector.shape_cast %44 : vector<16xf32> to vector<16x1xf32>
      %46 = arith.addf %41, %45 : vector<16x1xf32>
      %c0_25 = arith.constant 0 : index
      %c0_26 = arith.constant 0 : index
      %47 = vector.load %arg7[%c0_25, %c0_26] : memref<16x1xf32, #tpu.memory_space<vmem>>, vector<16x1xf32>
      tpu.vector_store %arg7[%c0_25, %c0_26], %46 {strides = array<i32>} : memref<16x1xf32, #tpu.memory_space<vmem>>, vector<16x1xf32>,
    } else {
    }
    %c0_i32_7 = arith.constant 0 : i32
    %15 = arith.cmpi eq, %arg1, %c0_i32_7 : i32
    %16 = arith.extui %15 : i1 to i32
    %c0_i32_8 = arith.constant 0 : i32
    %17 = arith.cmpi ne, %16, %c0_i32_8 : i32
    scf.if %17 {
      %c0_9 = arith.constant 0 : index
      %c0_10 = arith.constant 0 : index
      %18 = vector.load %arg5[%c0_9, %c0_10] : memref<16x1xf32, #tpu.memory_space<vmem>>, vector<16x1xf32>
      %c0_11 = arith.constant 0 : index
      %c0_12 = arith.constant 0 : index
      %19 = vector.load %arg6[%c0_11, %c0_12] : memref<16x1xf32, #tpu.memory_space<vmem>>, vector<16x1xf32>
      %20 = math.log %19 : vector<16x1xf32>
      %21 = arith.addf %18, %20 : vector<16x1xf32>
      %c-100_i32 = arith.constant -100 : i32
      %22 = vector.broadcast %c-100_i32 : i32 to vector<16x1xi32>
      %23 = arith.cmpi ne, %3, %22 : vector<16x1xi32>
      %c0_13 = arith.constant 0 : index
      %c0_14 = arith.constant 0 : index
      %24 = vector.load %arg7[%c0_13, %c0_14] : memref<16x1xf32, #tpu.memory_space<vmem>>, vector<16x1xf32>
      %25 = arith.subf %21, %24 : vector<16x1xf32>
      %cst = arith.constant 0.000000e+00 : f32
      %26 = vector.broadcast %cst : f32 to vector<16x1xf32>
      %27 = arith.select %23, %25, %26 : vector<16x1xi1>, vector<16x1xf32>
      %c0_15 = arith.constant 0 : index
      %c0_16 = arith.constant 0 : index
      %28 = vector.load %arg4[%c0_15, %c0_16] : memref<16x1xf32, #tpu.memory_space<vmem>>, vector<16x1xf32>
      tpu.vector_store %arg4[%c0_15, %c0_16], %27 {strides = array<i32>} : memref<16x1xf32, #tpu.memory_space<vmem>>, vector<16x1xf32>,
    } else {
    }
    return
  }
  func.func @transform_0(%arg0: i32, %arg1: i32) -> (i32, i32) {
    %c0_i32 = arith.constant 0 : i32
    return %arg0, %arg1 : i32, i32
  }
  func.func @transform_1(%arg0: i32, %arg1: i32) -> (i32, i32) {
    %c0_i32 = arith.constant 0 : i32
    %c0_i32_0 = arith.constant 0 : i32
    return %arg0, %c0_i32 : i32, i32
  }
  func.func @transform_2(%arg0: i32, %arg1: i32) -> (i32, i32) {
    %c0_i32 = arith.constant 0 : i32
    %c0_i32_0 = arith.constant 0 : i32
    return %arg0, %c0_i32 : i32, i32
  }
}

</mosaic_0001>

<llo_original>
// kernel: tpu_custom_call.1
$region0: #{tpu_custom_call.1}
  #allocation0 [shape = 'u32[]', space=smem, size = 0x4, offset = 0x4, fixed_abs, tag = 'smem constant byte address 0x4 - core index']
  #allocation1 [shape = 'u32[144,128]{1,0:T(1,128)}', space=vmem, size = 0x12000, scoped, tag = 'internal scratch']
  #allocation2 [shape = 'f32[16,1]{1,0:T(8,128)}', space=vmem, size = 0x2000, scoped, tag = 'scratch operand']
  #allocation3 [shape = 'f32[16,1]{1,0:T(8,128)}', space=vmem, size = 0x2000, scoped, tag = 'scratch operand']
  #allocation4 [shape = 'f32[16,1]{1,0:T(8,128)}', space=vmem, size = 0x2000, scoped, tag = 'scratch operand']
  %s0 = inlined_call_operand.vmem [shape: f32[8,32], index: 0, kind: input, shape index: {}]
  %s1 = inlined_call_operand.vmem [shape: s32[16,1], index: 1, kind: input, shape index: {}]
  %s2 = inlined_call_operand.vmem [shape: f32[16,1], index: 2, kind: output, shape index: {}]
  %s3 = sld [smem:[#allocation0]]
  $region30: #{tpu_custom_call.1} parent=0
    _
  %s5 = ssub.s32 1, %s3
  %s6 = scalar_select 0, %s5, %s3
  // Predicated region
  $region2: #{tpu_custom_call.1} parent=0 // pred_check
    _
  $region3: #{tpu_custom_call.1} parent=0 // pred_check_branch
    %8 = sbr.rel (0) target = $region5
  $region4: #{tpu_custom_call.1} parent=0 // pred_region
    _
  $region5: #{tpu_custom_call.1} parent=0 // pred_fallthru
    _
  // Predicated region
  $region6: #{tpu_custom_call.1} parent=0 // pred_check
    _
  $region7: #{tpu_custom_call.1} parent=0 // pred_check_branch
    %10 = sbr.rel (0) target = $region9
  $region8: #{tpu_custom_call.1} parent=0 // pred_region
    _
  $region9: #{tpu_custom_call.1} parent=0 // pred_fallthru
    _
  %p11 = scmp.eq.s32.totalorder 0, 0
  // Predicated region
  $region10: #{tpu_custom_call.1} parent=0 // pred_check
    %p12 = pneg %p11
  $region11: #{tpu_custom_call.1} parent=0 // pred_check_branch
    %14 = sbr.rel (%p12) target = $region13
  $region12: #{tpu_custom_call.1} parent=0 // pred_region
    %vm15 = vcmask 7168
    %16 = vst.msk [vmem:[#allocation2] sm:$0xff] %vm15, -3e+38
    %17 = vst.msk [vmem:[#allocation2 + $0x8] sm:$0xff] %vm15, -3e+38
    %18 = vst.msk [vmem:[#allocation3] sm:$0xff] %vm15, 0.0
    %19 = vst.msk [vmem:[#allocation3 + $0x8] sm:$0xff] %vm15, 0.0
    %20 = vst.msk [vmem:[#allocation4] sm:$0xff] %vm15, 0.0
    %21 = vst.msk [vmem:[#allocation4 + $0x8] sm:$0xff] %vm15, 0.0
  $region13: #{tpu_custom_call.1} parent=0 // pred_fallthru
    _
  %v22 = vld [vmem:[%s1] sm:$0xff]
  %v23 = vld [vmem:[%s1 + $0x8] sm:$0xff]
  %s24 = smul.u32 0, 128
  %v25 = vstv %s24
  %v26 = vsub.s32 %v22, %v25
  %v27 = vsub.s32 %v23, %v25
  %v28 = vlaneseq
  %v29 = vand.u32 %v28, 127
  %v30 = vld [vmem:[%s0] sm:$0xff]
  %v31 = vld [vmem:[%s0 + $0x8] sm:$0xff]
  %p32 = scmp.ne.s32.totalorder 0, 0
  // Predicated region
  $region14: #{tpu_custom_call.1} parent=0 // pred_check
    %p33 = pneg %p32
  $region15: #{tpu_custom_call.1} parent=0 // pred_check_branch
    %35 = sbr.rel (%p33) target = $region17
  $region16: #{tpu_custom_call.1} parent=0 // pred_region
    %36 = vmax.xlane.f32.xlu0 %v30
    %v37 = vpop.xlane.xlu0 %36
    %38 = vmax.xlane.f32.xlu0 %v31
    %v39 = vpop.xlane.xlu0 %38
    %v40 = vld [vmem:[#allocation2] sm:$0xff]
    %v41 = vld [vmem:[#allocation2 + $0x8] sm:$0xff]
    %v42 = vmax.f32 %v40, %v37
    %v43 = vmax.f32 %v41, %v39
    %v44 = vsub.f32 %v40, %v42
    %v45 = vsub.f32 %v41, %v43
    %v46 = vmul.f32 %v44, 1.442695
    %v47 = vpow.pop %v46
    %v48 = vmul.f32 %v45, 1.442695
    %v49 = vpow.pop %v48
    %51 = vset.pattern.permute.xlu0 0
    %52 = vperm.xlu0 %51, %v42
    %v53 = vpop.permute.xlu0 %52
    %56 = vset.pattern.permute.xlu0 0
    %57 = vperm.xlu0 %56, %v43
    %v58 = vpop.permute.xlu0 %57
    %v60 = vsub.f32 %v30, %v53
    %v61 = vsub.f32 %v31, %v58
    %v62 = vmul.f32 %v60, 1.442695
    %v63 = vpow.pop %v62
    %v64 = vmul.f32 %v61, 1.442695
    %v65 = vpow.pop %v64
    %v66 = vld [vmem:[#allocation3] sm:$0xff]
    %v67 = vld [vmem:[#allocation3 + $0x8] sm:$0xff]
    %v68 = vmul.f32 %v47, %v66
    %v69 = vmul.f32 %v49, %v67
    %70 = vadd.xlane.f32.xlu0 %v63
    %v71 = vpop.xlane.xlu0 %70
    %72 = vadd.xlane.f32.xlu0 %v65
    %v73 = vpop.xlane.xlu0 %72
    %v74 = vadd.f32 %v68, %v71
    %v75 = vadd.f32 %v69, %v73
    %vm76 = vcmask 7168
    %77 = vst.msk [vmem:[#allocation3] sm:$0xff] %vm76, %v74
    %78 = vst.msk [vmem:[#allocation3 + $0x8] sm:$0xff] %vm76, %v75
    %79 = vst.msk [vmem:[#allocation2] sm:$0xff] %vm76, %v42
    %80 = vst.msk [vmem:[#allocation2 + $0x8] sm:$0xff] %vm76, %v43
    %81 = vset.pattern.permute.xlu0 0
    %82 = vperm.xlu0 %81, %v26
    %v83 = vpop.permute.xlu0 %82
    %84 = vset.pattern.permute.xlu0 0
    %85 = vperm.xlu0 %84, %v27
    %v86 = vpop.permute.xlu0 %85
    %vm87 = vcmp.eq.s32.totalorder %v29, %v83
    %vm88 = vcmp.eq.s32.totalorder %v29, %v86
    %v89 = vld [vmem:[#allocation4] sm:$0xff]
    %v90 = vld [vmem:[#allocation4 + $0x8] sm:$0xff]
    %v91 = vsel %vm87, %v30, 0.0
    %v92 = vsel %vm88, %v31, 0.0
    %93 = vadd.xlane.f32.xlu0 %v91
    %v94 = vpop.xlane.xlu0 %93
    %95 = vadd.xlane.f32.xlu0 %v92
    %v96 = vpop.xlane.xlu0 %95
    %v97 = vadd.f32 %v89, %v94
    %v98 = vadd.f32 %v90, %v96
    %99 = vst.msk [vmem:[#allocation4] sm:$0xff] %vm76, %v97
    %100 = vst.msk [vmem:[#allocation4 + $0x8] sm:$0xff] %vm76, %v98
  $region17: #{tpu_custom_call.1} parent=0 // pred_fallthru
    _
  // Predicated region
  $region18: #{tpu_custom_call.1} parent=0 // pred_check
    %p101 = pneg %p11
  $region19: #{tpu_custom_call.1} parent=0 // pred_check_branch
    %103 = sbr.rel (%p101) target = $region21
  $region20: #{tpu_custom_call.1} parent=0 // pred_region
    %vm104 = vcmp.lt.s32.totalorder %v29, 32
    %v105 = vsel %vm104, %v30, -1e+30
    %v106 = vsel %vm104, %v31, -1e+30
    %107 = vmax.xlane.f32.xlu0 %v105
    %v108 = vpop.xlane.xlu0 %107
    %109 = vmax.xlane.f32.xlu0 %v106
    %v110 = vpop.xlane.xlu0 %109
    %v111 = vld [vmem:[#allocation2] sm:$0xff]
    %v112 = vld [vmem:[#allocation2 + $0x8] sm:$0xff]
    %v113 = vmax.f32 %v111, %v108
    %v114 = vmax.f32 %v112, %v110
    %v115 = vsub.f32 %v111, %v113
    %v116 = vsub.f32 %v112, %v114
    %v117 = vmul.f32 %v115, 1.442695
    %v118 = vpow.pop %v117
    %v119 = vmul.f32 %v116, 1.442695
    %v120 = vpow.pop %v119
    %122 = vset.pattern.permute.xlu0 0
    %123 = vperm.xlu0 %122, %v113
    %v124 = vpop.permute.xlu0 %123
    %127 = vset.pattern.permute.xlu0 0
    %128 = vperm.xlu0 %127, %v114
    %v129 = vpop.permute.xlu0 %128
    %v131 = vsub.f32 %v105, %v124
    %v132 = vsub.f32 %v106, %v129
    %v133 = vmul.f32 %v131, 1.442695
    %v134 = vpow.pop %v133
    %v135 = vmul.f32 %v132, 1.442695
    %v136 = vpow.pop %v135
    %v137 = vld [vmem:[#allocation3] sm:$0xff]
    %v138 = vld [vmem:[#allocation3 + $0x8] sm:$0xff]
    %v139 = vmul.f32 %v118, %v137
    %v140 = vmul.f32 %v120, %v138
    %141 = vadd.xlane.f32.xlu0 %v134
    %v142 = vpop.xlane.xlu0 %141
    %143 = vadd.xlane.f32.xlu0 %v136
    %v144 = vpop.xlane.xlu0 %143
    %v145 = vadd.f32 %v139, %v142
    %v146 = vadd.f32 %v140, %v144
    %vm147 = vcmask 7168
    %148 = vst.msk [vmem:[#allocation3] sm:$0xff] %vm147, %v145
    %149 = vst.msk [vmem:[#allocation3 + $0x8] sm:$0xff] %vm147, %v146
    %150 = vst.msk [vmem:[#allocation2] sm:$0xff] %vm147, %v113
    %151 = vst.msk [vmem:[#allocation2 + $0x8] sm:$0xff] %vm147, %v114
    %152 = vset.pattern.permute.xlu0 0
    %153 = vperm.xlu0 %152, %v26
    %v154 = vpop.permute.xlu0 %153
    %155 = vset.pattern.permute.xlu0 0
    %156 = vperm.xlu0 %155, %v27
    %v157 = vpop.permute.xlu0 %156
    %vm158 = vcmp.eq.s32.totalorder %v29, %v154
    %vm159 = vcmp.eq.s32.totalorder %v29, %v157
    %v160 = vld [vmem:[#allocation4] sm:$0xff]
    %v161 = vld [vmem:[#allocation4 + $0x8] sm:$0xff]
    %v162 = vsel %vm158, %v105, 0.0
    %v163 = vsel %vm159, %v106, 0.0
    %164 = vadd.xlane.f32.xlu0 %v162
    %v165 = vpop.xlane.xlu0 %164
    %166 = vadd.xlane.f32.xlu0 %v163
    %v167 = vpop.xlane.xlu0 %166
    %v168 = vadd.f32 %v160, %v165
    %v169 = vadd.f32 %v161, %v167
    %170 = vst.msk [vmem:[#allocation4] sm:$0xff] %vm147, %v168
    %171 = vst.msk [vmem:[#allocation4 + $0x8] sm:$0xff] %vm147, %v169
    %v172 = vld [vmem:[#allocation2] sm:$0xff]
    %v173 = vld [vmem:[#allocation2 + $0x8] sm:$0xff]
    %v174 = vld [vmem:[#allocation3] sm:$0xff]
    %v175 = vld [vmem:[#allocation3 + $0x8] sm:$0xff]
    %v176 = vlog2.pop %v174
    %v177 = vmul.f32 %v176, 0.6931472
    %v178 = vlog2.pop %v175
    %v179 = vmul.f32 %v178, 0.6931472
    %v180 = vadd.f32 %v172, %v177
    %v181 = vadd.f32 %v173, %v179
    %vm182 = vcmp.ne.s32.totalorder %v22, 4294967196
    %vm183 = vcmp.ne.s32.totalorder %v23, 4294967196
    %v184 = vld [vmem:[#allocation4] sm:$0xff]
    %v185 = vld [vmem:[#allocation4 + $0x8] sm:$0xff]
    %v186 = vsub.f32 %v180, %v184
    %v187 = vsub.f32 %v181, %v185
    %v188 = vsel %vm182, %v186, 0.0
    %v189 = vsel %vm183, %v187, 0.0
    %190 = vst.msk [vmem:[%s2] sm:$0xff] %vm147, %v188
    %191 = vst.msk [vmem:[%s2 + $0x8] sm:$0xff] %vm147, %v189
  $region21: #{tpu_custom_call.1} parent=0 // pred_fallthru
    _
  // Predicated region
  $region22: #{tpu_custom_call.1} parent=0 // pred_check
    _
  $region23: #{tpu_custom_call.1} parent=0 // pred_check_branch
    %193 = sbr.rel (0) target = $region25
  $region24: #{tpu_custom_call.1} parent=0 // pred_region
    _
  $region25: #{tpu_custom_call.1} parent=0 // pred_fallthru
    _
  // Predicated region
  $region26: #{tpu_custom_call.1} parent=0 // pred_check
    _
  $region27: #{tpu_custom_call.1} parent=0 // pred_check_branch
    %195 = sbr.rel (0) target = $region29
  $region28: #{tpu_custom_call.1} parent=0 // pred_region
    _
  $region29: #{tpu_custom_call.1} parent=0 // pred_fallthru
    _

</llo_original>
